<compile_context>
chip_gen: v7x
topology: tpu7x:2x2x1
jax: 0.10.0
libtpu: 0.0.40
codegen_flags: <defaults>
</compile_context>

<pallas_src>
import jax
import jax.numpy as jnp
from jax.experimental import pallas as pl
from jax.experimental.pallas import tpu as pltpu

HIDDEN = 64          # fixed by the module: nn.Linear(embedding_dim, 64)
LANE = 128
SUBLANE_BF16 = 16    # bf16 packs 2 rows per sublane -> tile_b multiple of 16


def _round_up(x, m):
    return (x + m - 1) // m * m


# ---------------------------------------------------------------------------
# Pallas kernel: fused  sigmoid( relu(x @ W1 + b1) @ W2 + b2 )  for all heads
# ---------------------------------------------------------------------------
def multitask_heads_kernel(x_ref, w1_ref, b1_ref, w2_ref, b2_ref, out_ref):
    x = x_ref[...].astype(w1_ref.dtype)                               # (tb, D) f32 -> bf16
    h = jnp.dot(x, w1_ref[...], preferred_element_type=jnp.float32)   # (tb, Ht) f32
    h = jnp.maximum(h + b1_ref[...], 0.0)                             # ReLU
    z = jnp.dot(h.astype(w2_ref.dtype), w2_ref[...],
                preferred_element_type=jnp.float32)                   # (tb, Op) f32
    z = z + b2_ref[...]
    # Sigmoid: exp on the EUP, approx reciprocal on the EUP (frees VALU slots),
    # clamp so the probability never exceeds 1.0 from the approximation.
    e = jnp.exp(-z)
    p = pl.reciprocal(1.0 + e, approx=True)
    out_ref[...] = jnp.minimum(p, 1.0).astype(out_ref.dtype)


# ---------------------------------------------------------------------------
# Host-side weight packing (done once; weights are static)
# ---------------------------------------------------------------------------
def pack_params(heads, embedding_dim, dtype=jnp.bfloat16):
    """heads: list of (W1 (D,64), b1 (64,), W2 (64,O_h), b2 (O_h,)).

    Compact packing: hidden blocks at row offsets 0/64/128 (Ht = 3*64 = 192),
    W2 block-diagonal, outputs concatenated and padded to a lane multiple.
    """
    D = embedding_dim
    n_heads = len(heads)
    Ht = n_heads * HIDDEN                              # 192: no per-head lane padding
    out_dims = [W2.shape[1] for (_, _, W2, _) in heads]
    Ot = sum(out_dims)
    Op = _round_up(Ot, LANE)                           # lane-dense packed output

    w1 = jnp.zeros((D, Ht), jnp.float32)
    b1 = jnp.zeros((1, Ht), jnp.float32)
    w2 = jnp.zeros((Ht, Op), jnp.float32)
    b2 = jnp.zeros((1, Op), jnp.float32)

    col = 0
    for hid, (W1, b1_h, W2, b2_h) in enumerate(heads):
        row = hid * HIDDEN
        O_h = W2.shape[1]
        w1 = w1.at[:, row:row + HIDDEN].set(W1)
        b1 = b1.at[0, row:row + HIDDEN].set(b1_h)
        w2 = w2.at[row:row + HIDDEN, col:col + O_h].set(W2)
        b2 = b2.at[0, col:col + O_h].set(b2_h)
        col += O_h

    packed = (w1.astype(dtype), b1, w2.astype(dtype), b2)
    dims = (D, Ht, Op)
    return packed, dims, tuple(out_dims)


# ---------------------------------------------------------------------------
# Forward wrapper
# ---------------------------------------------------------------------------
def multitask_heads_forward(user_emb, packed, dims, out_dims, *,
                            tile_b=512, out_dtype=jnp.float32):
    w1, b1, w2, b2 = packed
    D, Ht, Op = dims
    B, Dx = user_emb.shape
    assert Dx == D, (Dx, D)

    # Batch tile: multiple of 16 (bf16 sublane pack).  Defaults large so the
    # MXU M dim is filled (>=256 ideal on v6e/v7x, >=128 on v5e); clamp to the
    # (rounded) batch so tiny batches still run in a single grid step.
    tile_b = max(SUBLANE_BF16, min(tile_b, _round_up(B, SUBLANE_BF16)))
    tile_b = _round_up(tile_b, SUBLANE_BF16)
    grid_b = pl.cdiv(B, tile_b)           # partial last tile masked by Pallas

    # Advisory cost estimate: 2 matmuls + exp/reciprocal epilogue.
    flops = 2 * B * (D * Ht + Ht * Op)
    bytes_accessed = (B * D * 4 + B * Op * jnp.dtype(out_dtype).itemsize
                      + (D * Ht + Ht * Op) * 2 + (Ht + Op) * 4)
    cost = pl.CostEstimate(flops=flops,
                           transcendentals=2 * B * Op,
                           bytes_accessed=bytes_accessed)

    out = pl.pallas_call(
        multitask_heads_kernel,
        grid=(grid_b,),
        out_shape=jax.ShapeDtypeStruct((B, Op), out_dtype),
        in_specs=[
            pl.BlockSpec((tile_b, D), lambda i: (i, 0)),   # user_emb tile (raw f32)
            pl.BlockSpec((D, Ht), lambda i: (0, 0)),       # packed W1 (resident)
            pl.BlockSpec((1, Ht), lambda i: (0, 0)),       # packed b1
            pl.BlockSpec((Ht, Op), lambda i: (0, 0)),      # packed W2 (resident)
            pl.BlockSpec((1, Op), lambda i: (0, 0)),       # packed b2
        ],
        out_specs=pl.BlockSpec((tile_b, Op), lambda i: (i, 0)),
        compiler_params=pltpu.CompilerParams(
            dimension_semantics=("parallel",)),            # shards tiles on v7x 2-TC
        cost_estimate=cost,
    )(user_emb, w1, b1, w2, b2)

    # Slice the lane-dense packed output back into the three head outputs.
    results = []
    col = 0
    for O_h in out_dims:
        results.append(out[:, col:col + O_h])
        col += O_h
    return tuple(results)   # (churn, category, sku)


# ---------------------------------------------------------------------------
# Deterministic parameter construction (matches nn.Linear init bounds)
# ---------------------------------------------------------------------------
def init_params(key, embedding_dim, num_categories, num_skus):
    out_dims = (1, num_categories, num_skus)   # churn, category, sku
    heads = []
    for O in out_dims:
        key, k1, k2, k3, k4 = jax.random.split(key, 5)
        bnd1 = 1.0 / (embedding_dim ** 0.5)
        W1 = jax.random.uniform(k1, (embedding_dim, HIDDEN), jnp.float32, -bnd1, bnd1)
        b1 = jax.random.uniform(k2, (HIDDEN,), jnp.float32, -bnd1, bnd1)
        bnd2 = 1.0 / (HIDDEN ** 0.5)
        W2 = jax.random.uniform(k3, (HIDDEN, O), jnp.float32, -bnd2, bnd2)
        b2 = jax.random.uniform(k4, (O,), jnp.float32, -bnd2, bnd2)
        heads.append((W1, b1, W2, b2))
    return heads, key


def ref_forward(x, heads):
    outs = []
    for (W1, b1, W2, b2) in heads:
        h = jnp.maximum(x @ W1 + b1, 0.0)
        outs.append(jax.nn.sigmoid(h @ W2 + b2))
    return tuple(outs)


# ---------------------------------------------------------------------------
if __name__ == "__main__":
    key = jax.random.PRNGKey(0)

    batch = 40              # exercises a multi-step grid AND a partial last tile
    embedding_dim = 48
    num_categories = 10
    num_skus = 37

    heads, key = init_params(key, embedding_dim, num_categories, num_skus)
    key, kx = jax.random.split(key)
    user_emb = jax.random.normal(kx, (batch, embedding_dim), jnp.float32)

    packed, dims, out_dims = pack_params(heads, embedding_dim)

    # tile_b=16 here only to exercise multiple grid steps + the batch tail at
    # demo scale; production default (512) fills the MXU on all generations.
    churn, category, sku = jax.block_until_ready(
        multitask_heads_forward(user_emb, packed, dims, out_dims, tile_b=16))

    # shape / semantics checks
    assert churn.shape == (batch, 1)
    assert category.shape == (batch, num_categories)
    assert sku.shape == (batch, num_skus)
    for t in (churn, category, sku):
        assert t.dtype == jnp.float32
        assert bool(jnp.all((t >= 0.0) & (t <= 1.0)))   # sigmoid range

    # numerical check against a pure-JAX f32 reference (bf16 MXU tolerance)
    ref = ref_forward(user_emb, heads)
    for got, want in zip((churn, category, sku), ref):
        assert bool(jnp.allclose(got, want, atol=2e-2, rtol=0.0)), \
            float(jnp.max(jnp.abs(got - want)))

    print("KERNEL_OK")
</pallas_src>

<mosaic_0001>
module attributes {stable_mosaic.version = 11 : i64} {
  func.func @multitask_heads_kernel(%arg0: i32, %arg1: memref<16x48xf32, #tpu.memory_space<vmem>>, %arg2: memref<48x192xbf16, #tpu.memory_space<vmem>>, %arg3: memref<1x192xf32, #tpu.memory_space<vmem>>, %arg4: memref<192x128xbf16, #tpu.memory_space<vmem>>, %arg5: memref<1x128xf32, #tpu.memory_space<vmem>>, %arg6: memref<16x128xf32, #tpu.memory_space<vmem>>) attributes {dimension_semantics = [#tpu.dimension_semantics<parallel>], iteration_bounds = array<i64: 3>, scalar_prefetch = 0 : i64, scratch_operands = 0 : i64, tpu.core_type = #tpu.core_type<tc>, window_params = [{transform_indices = @transform_0, window_bounds = array<i64: 16, 48>}, {pipeline_mode = #tpu.pipeline_mode<synchronous>, transform_indices = @transform_1, window_bounds = array<i64: 48, 192>}, {pipeline_mode = #tpu.pipeline_mode<synchronous>, transform_indices = @transform_2, window_bounds = array<i64: 1, 192>}, {pipeline_mode = #tpu.pipeline_mode<synchronous>, transform_indices = @transform_3, window_bounds = array<i64: 192, 128>}, {pipeline_mode = #tpu.pipeline_mode<synchronous>, transform_indices = @transform_4, window_bounds = array<i64: 1, 128>}, {transform_indices = @transform_5, window_bounds = array<i64: 16, 128>}]} {
    %c0 = arith.constant 0 : index
    %c0_0 = arith.constant 0 : index
    %0 = vector.load %arg1[%c0, %c0_0] : memref<16x48xf32, #tpu.memory_space<vmem>>, vector<16x48xf32>
    %1 = arith.truncf %0 : vector<16x48xf32> to vector<16x48xbf16>
    %c0_1 = arith.constant 0 : index
    %c0_2 = arith.constant 0 : index
    %2 = vector.load %arg2[%c0_1, %c0_2] : memref<48x192xbf16, #tpu.memory_space<vmem>>, vector<48x192xbf16>
    %cst = arith.constant dense<0.000000e+00> : vector<16x192xf32>
    %3 = tpu.matmul %1, %2, %cst {dimension_numbers = #tpu.dot_dimension_numbers<[1], [0], [0], [1], [0, 0, 1, 1], [], []>} : vector<16x48xbf16>, vector<48x192xbf16>, vector<16x192xf32> -> vector<16x192xf32>
    %c0_3 = arith.constant 0 : index
    %c0_4 = arith.constant 0 : index
    %4 = vector.load %arg3[%c0_3, %c0_4] : memref<1x192xf32, #tpu.memory_space<vmem>>, vector<1x192xf32>
    %5 = vector.broadcast %4 : vector<1x192xf32> to vector<16x192xf32>
    %6 = arith.addf %3, %5 : vector<16x192xf32>
    %cst_5 = arith.constant 0.000000e+00 : f32
    %7 = vector.broadcast %cst_5 : f32 to vector<16x192xf32>
    %8 = arith.maximumf %6, %7 : vector<16x192xf32>
    %9 = arith.truncf %8 : vector<16x192xf32> to vector<16x192xbf16>
    %c0_6 = arith.constant 0 : index
    %c0_7 = arith.constant 0 : index
    %10 = vector.load %arg4[%c0_6, %c0_7] : memref<192x128xbf16, #tpu.memory_space<vmem>>, vector<192x128xbf16>
    %cst_8 = arith.constant dense<0.000000e+00> : vector<16x128xf32>
    %11 = tpu.matmul %9, %10, %cst_8 {dimension_numbers = #tpu.dot_dimension_numbers<[1], [0], [0], [1], [0, 0, 1, 1], [], []>} : vector<16x192xbf16>, vector<192x128xbf16>, vector<16x128xf32> -> vector<16x128xf32>
    %c0_9 = arith.constant 0 : index
    %c0_10 = arith.constant 0 : index
    %12 = vector.load %arg5[%c0_9, %c0_10] : memref<1x128xf32, #tpu.memory_space<vmem>>, vector<1x128xf32>
    %13 = vector.broadcast %12 : vector<1x128xf32> to vector<16x128xf32>
    %14 = arith.addf %11, %13 : vector<16x128xf32>
    %cst_11 = arith.constant 0.000000e+00 : f32
    %15 = vector.broadcast %cst_11 : f32 to vector<16x128xf32>
    %16 = arith.subf %15, %14 : vector<16x128xf32>
    %17 = math.exp %16 : vector<16x128xf32>
    %cst_12 = arith.constant 1.000000e+00 : f32
    %18 = vector.broadcast %cst_12 : f32 to vector<16x128xf32>
    %19 = arith.addf %18, %17 : vector<16x128xf32>
    %20 = tpu.reciprocal %19 {approx = true} : vector<16x128xf32> -> vector<16x128xf32>
    %cst_13 = arith.constant 1.000000e+00 : f32
    %21 = vector.broadcast %cst_13 : f32 to vector<16x128xf32>
    %22 = arith.minimumf %20, %21 : vector<16x128xf32>
    %c0_14 = arith.constant 0 : index
    %c0_15 = arith.constant 0 : index
    %23 = vector.load %arg6[%c0_14, %c0_15] : memref<16x128xf32, #tpu.memory_space<vmem>>, vector<16x128xf32>
    tpu.vector_store %arg6[%c0_14, %c0_15], %22 {strides = array<i32>} : memref<16x128xf32, #tpu.memory_space<vmem>>, vector<16x128xf32>,
    return
  }
  func.func @transform_0(%arg0: i32) -> (i32, i32) {
    %c0_i32 = arith.constant 0 : i32
    %c0_i32_0 = arith.constant 0 : i32
    return %arg0, %c0_i32 : i32, i32
  }
  func.func @transform_1(%arg0: i32) -> (i32, i32) {
    %c0_i32 = arith.constant 0 : i32
    %c0_i32_0 = arith.constant 0 : i32
    %c0_i32_1 = arith.constant 0 : i32
    return %c0_i32, %c0_i32_0 : i32, i32
  }
  func.func @transform_2(%arg0: i32) -> (i32, i32) {
    %c0_i32 = arith.constant 0 : i32
    %c0_i32_0 = arith.constant 0 : i32
    %c0_i32_1 = arith.constant 0 : i32
    return %c0_i32, %c0_i32_0 : i32, i32
  }
  func.func @transform_3(%arg0: i32) -> (i32, i32) {
    %c0_i32 = arith.constant 0 : i32
    %c0_i32_0 = arith.constant 0 : i32
    %c0_i32_1 = arith.constant 0 : i32
    return %c0_i32, %c0_i32_0 : i32, i32
  }
  func.func @transform_4(%arg0: i32) -> (i32, i32) {
    %c0_i32 = arith.constant 0 : i32
    %c0_i32_0 = arith.constant 0 : i32
    %c0_i32_1 = arith.constant 0 : i32
    return %c0_i32, %c0_i32_0 : i32, i32
  }
  func.func @transform_5(%arg0: i32) -> (i32, i32) {
    %c0_i32 = arith.constant 0 : i32
    %c0_i32_0 = arith.constant 0 : i32
    return %arg0, %c0_i32 : i32, i32
  }
}

</mosaic_0001>

<llo_original>
// kernel: tpu_custom_call.1
$region0: #{tpu_custom_call.1}
  #allocation0 [shape = 'u32[]', space=smem, size = 0x4, offset = 0x4, fixed_abs, tag = 'smem constant byte address 0x4 - core index']
  #allocation1 [shape = 'u32[144,128]{1,0:T(1,128)}', space=vmem, size = 0x12000, scoped, tag = 'internal scratch']
  %s0 = inlined_call_operand.hbm [shape: f32[40,48], index: 0, kind: input, shape index: {}]
  %s1 = inlined_call_operand.hbm [shape: bf16[48,192], index: 1, kind: input, shape index: {}]
  %s2 = inlined_call_operand.vmem [shape: f32[1,192], index: 2, kind: input, shape index: {}]
  %s3 = inlined_call_operand.hbm [shape: bf16[192,128], index: 3, kind: input, shape index: {}]
  %s4 = inlined_call_operand.vmem [shape: f32[1,128], index: 4, kind: input, shape index: {}]
  %s5 = inlined_call_operand.hbm [shape: f32[40,128], index: 5, kind: output, shape index: {}]
  %s6 = sld [smem:[#allocation0]]
  $region65: #{tpu_custom_call.1} parent=0
    _
  %s8 = ssub.s32 1, %s6
  %s9 = scalar_select 0, %s8, %s6
  $region1: #{tpu_custom_call.1} parent=0
    #allocation2 [shape = 'u8[16384]{0}', space=vmem, size = 0x4000, scoped, tag = 'input window, operand 0']
    #allocation3 [shape = 's32[2]{0}', space=sflag, size = 0x8, scoped, tag = 'scoped memory for tpu_custom_call.1']
    #allocation4 [shape = 's32[2]{0}', space=sflag, size = 0x8, scoped, tag = 'scoped memory for tpu_custom_call.1']
    #allocation5 [shape = 'u8[24576]{0}', space=vmem, size = 0x6000, scoped, tag = 'input window, operand 1, single buffered']
    #allocation6 [shape = 's32[1]{0}', space=sflag, size = 0x4, scoped, tag = 'scoped memory for tpu_custom_call.1']
    #allocation7 [shape = 'u8[49152]{0}', space=vmem, size = 0xc000, scoped, tag = 'input window, operand 3, single buffered']
    #allocation8 [shape = 'u8[16384]{0}', space=vmem, size = 0x4000, scoped, tag = 'output window, operand 0']
    %10 = vsyncpa [#allocation3], 0
    %s11 = scalar_lea.sflag [#allocation3], 1
    %12 = vsyncpa %s11, 0
    %13 = vsyncpa [#allocation6], 0
    %14 = vsyncpa [#allocation4], 0
    %s15 = scalar_lea.sflag [#allocation4], 1
    %16 = vsyncpa %s15, 0
    loop: start=0, step=1, limit=5
    $region2: #{tpu_custom_call.1} parent=1 // loop_pre_header
      _
    $region3: #{tpu_custom_call.1} parent=1 // loop_header
      %s18 = sphi 0, %s22
      %p19 = scmp.ge.s32.totalorder %s18, 5
      %s28 = sphi 0, %s30
      %s31 = sphi 0, %s28
      %s32 = sphi 0, %s31
      %s48 = sphi 0, %s32
      %s52 = sphi 0, %s52
      %s54 = sphi 0, %s52
      %s55 = sphi 0, %s54
      %s69 = sphi 0, %s55
      %s73 = sphi 0, %s73
      %s75 = sphi 0, %s73
      %s76 = sphi 0, %s75
      %s90 = sphi 0, %s76
      %s94 = sphi 0, %s94
      %s96 = sphi 0, %s94
      %s97 = sphi 0, %s96
      %s111 = sphi 0, %s97
      %s115 = sphi 0, %s115
      %s117 = sphi 0, %s115
      %s118 = sphi 0, %s117
      %s132 = sphi 0, %s118
      %s138 = sphi 0, %s140
      %s141 = sphi 0, %s138
      %s142 = sphi 0, %s141
      %s158 = sphi 0, %s142
    $region4: #{tpu_custom_call.1} parent=1 // loop_header_branch
      %21 = sbr.rel (%p19) target = $region8
    $region5: #{tpu_custom_call.1} parent=1 // loop_body
      %s23 = ssub.s32 %s18, 1
      %s24 = ssub.s32 %s18, 2
      %s25 = sadd.s32 %s18, 1
      %s26 = ssub.s32 %s18, %s25
      %p27 = scmp.eq.s32.totalorder %s26, 0
      %s29 = sadd.s32 %s28, 1
      %s30 = scalar_select %p27, %s28, %s29
      %p33 = pneg %p27
      %p34 = scmp.eq.s32.totalorder %s18, 2
      %p35 = por %p33, %p34
      %p36 = scmp.ne.s32.totalorder %s28, %s31
      %p37 = scmp.eq.s32.totalorder %s18, 0
      %p38 = por %p36, %p37
      %p39 = scmp.ne.s32.totalorder %s28, %s31
      %p40 = scmp.eq.s32.totalorder %s23, 2
      %p41 = por %p39, %p40
      %p42 = scmp.ne.s32.totalorder %s31, %s32
      %p43 = scmp.eq.s32.totalorder %s23, 0
      %p44 = por %p42, %p43
      %p45 = scmp.ne.s32.totalorder %s31, %s32
      %p46 = scmp.eq.s32.totalorder %s24, 2
      %p47 = por %p45, %p46
      %p49 = scmp.ne.s32.totalorder %s32, %s48
      %p50 = scmp.eq.s32.totalorder %s24, 0
      %p51 = por %p49, %p50
      %s53 = sadd.s32 %s52, 1
      %p56 = scmp.eq.s32.totalorder %s18, 2
      %p57 = scmp.ne.s32.totalorder %s52, %s54
      %p58 = scmp.eq.s32.totalorder %s18, 0
      %p59 = por %p57, %p58
      %p60 = scmp.ne.s32.totalorder %s52, %s54
      %p61 = scmp.eq.s32.totalorder %s23, 2
      %p62 = por %p60, %p61
      %p63 = scmp.ne.s32.totalorder %s54, %s55
      %p64 = scmp.eq.s32.totalorder %s23, 0
      %p65 = por %p63, %p64
      %p66 = scmp.ne.s32.totalorder %s54, %s55
      %p67 = scmp.eq.s32.totalorder %s24, 2
      %p68 = por %p66, %p67
      %p70 = scmp.ne.s32.totalorder %s55, %s69
      %p71 = scmp.eq.s32.totalorder %s24, 0
      %p72 = por %p70, %p71
      %s74 = sadd.s32 %s73, 1
      %p77 = scmp.eq.s32.totalorder %s18, 2
      %p78 = scmp.ne.s32.totalorder %s73, %s75
      %p79 = scmp.eq.s32.totalorder %s18, 0
      %p80 = por %p78, %p79
      %p81 = scmp.ne.s32.totalorder %s73, %s75
      %p82 = scmp.eq.s32.totalorder %s23, 2
      %p83 = por %p81, %p82
      %p84 = scmp.ne.s32.totalorder %s75, %s76
      %p85 = scmp.eq.s32.totalorder %s23, 0
      %p86 = por %p84, %p85
      %p87 = scmp.ne.s32.totalorder %s75, %s76
      %p88 = scmp.eq.s32.totalorder %s24, 2
      %p89 = por %p87, %p88
      %p91 = scmp.ne.s32.totalorder %s76, %s90
      %p92 = scmp.eq.s32.totalorder %s24, 0
      %p93 = por %p91, %p92
      %s95 = sadd.s32 %s94, 1
      %p98 = scmp.eq.s32.totalorder %s18, 2
      %p99 = scmp.ne.s32.totalorder %s94, %s96
      %p100 = scmp.eq.s32.totalorder %s18, 0
      %p101 = por %p99, %p100
      %p102 = scmp.ne.s32.totalorder %s94, %s96
      %p103 = scmp.eq.s32.totalorder %s23, 2
      %p104 = por %p102, %p103
      %p105 = scmp.ne.s32.totalorder %s96, %s97
      %p106 = scmp.eq.s32.totalorder %s23, 0
      %p107 = por %p105, %p106
      %p108 = scmp.ne.s32.totalorder %s96, %s97
      %p109 = scmp.eq.s32.totalorder %s24, 2
      %p110 = por %p108, %p109
      %p112 = scmp.ne.s32.totalorder %s97, %s111
      %p113 = scmp.eq.s32.totalorder %s24, 0
      %p114 = por %p112, %p113
      %s116 = sadd.s32 %s115, 1
      %p119 = scmp.eq.s32.totalorder %s18, 2
      %p120 = scmp.ne.s32.totalorder %s115, %s117
      %p121 = scmp.eq.s32.totalorder %s18, 0
      %p122 = por %p120, %p121
      %p123 = scmp.ne.s32.totalorder %s115, %s117
      %p124 = scmp.eq.s32.totalorder %s23, 2
      %p125 = por %p123, %p124
      %p126 = scmp.ne.s32.totalorder %s117, %s118
      %p127 = scmp.eq.s32.totalorder %s23, 0
      %p128 = por %p126, %p127
      %p129 = scmp.ne.s32.totalorder %s117, %s118
      %p130 = scmp.eq.s32.totalorder %s24, 2
      %p131 = por %p129, %p130
      %p133 = scmp.ne.s32.totalorder %s118, %s132
      %p134 = scmp.eq.s32.totalorder %s24, 0
      %p135 = por %p133, %p134
      %s136 = ssub.s32 %s18, %s25
      %p137 = scmp.eq.s32.totalorder %s136, 0
      %s139 = sadd.s32 %s138, 1
      %s140 = scalar_select %p137, %s138, %s139
      %p143 = pneg %p137
      %p144 = scmp.eq.s32.totalorder %s18, 2
      %p145 = por %p143, %p144
      %p146 = scmp.ne.s32.totalorder %s138, %s141
      %p147 = scmp.eq.s32.totalorder %s18, 0
      %p148 = por %p146, %p147
      %p149 = scmp.ne.s32.totalorder %s138, %s141
      %p150 = scmp.eq.s32.totalorder %s23, 2
      %p151 = por %p149, %p150
      %p152 = scmp.ne.s32.totalorder %s141, %s142
      %p153 = scmp.eq.s32.totalorder %s23, 0
      %p154 = por %p152, %p153
      %p155 = scmp.ne.s32.totalorder %s141, %s142
      %p156 = scmp.eq.s32.totalorder %s24, 2
      %p157 = por %p155, %p156
      %p159 = scmp.ne.s32.totalorder %s142, %s158
      %p160 = scmp.eq.s32.totalorder %s24, 0
      %p161 = por %p159, %p160
      %p162 = scmp.le.s32.totalorder 1, %s18
      %p163 = scmp.lt.s32.totalorder %s18, 4
      %p164 = pnand %p162, %p163
      %p165 = pneg %p164
      // Predicated region
      $region9: #{tpu_custom_call.1} parent=5 // pred_check
        _
      $region10: #{tpu_custom_call.1} parent=5 // pred_check_branch
        %167 = sbr.rel (%p164) target = $region12
      $region11: #{tpu_custom_call.1} parent=5 // pred_region
        %s168 = ssub.s32 %s18, 1
        // Predicated region
        $region13: #{tpu_custom_call.1} parent=11 // pred_check
          %p169 = pneg %p65
        $region14: #{tpu_custom_call.1} parent=11 // pred_check_branch
          %171 = sbr.rel (%p169) target = $region16
        $region15: #{tpu_custom_call.1} parent=11 // pred_region
          %s173 = ssub.s32 768, 768
          %174 = vsyncadd [#allocation6], %s173
          %s175 = sshll.u32 [#allocation5], 4
          %s176 = int_to_ptr.vmem [resolvable:$true] %s175
          %181 = dma.hbm_to_vmem [thread:$0]  %s1, 768, %s176, [#allocation6], 128, 128, 8
        $region16: #{tpu_custom_call.1} parent=11 // pred_fallthru
          _
        // Predicated region
        $region17: #{tpu_custom_call.1} parent=11 // pred_check
          %p182 = pneg %p86
        $region18: #{tpu_custom_call.1} parent=11 // pred_check_branch
          %184 = sbr.rel (%p182) target = $region20
        $region19: #{tpu_custom_call.1} parent=11 // pred_region
          _
        $region20: #{tpu_custom_call.1} parent=11 // pred_fallthru
          _
        // Predicated region
        $region21: #{tpu_custom_call.1} parent=11 // pred_check
          %p185 = pneg %p107
        $region22: #{tpu_custom_call.1} parent=11 // pred_check_branch
          %187 = sbr.rel (%p185) target = $region24
        $region23: #{tpu_custom_call.1} parent=11 // pred_region
          %s189 = ssub.s32 1536, 1536
          %190 = vsyncadd [#allocation6], %s189
          %s191 = sshll.u32 [#allocation7], 4
          %s192 = int_to_ptr.vmem [resolvable:$true] %s191
          %197 = dma.hbm_to_vmem [thread:$0]  %s3, 1536, %s192, [#allocation6], 64, 64, 4
        $region24: #{tpu_custom_call.1} parent=11 // pred_fallthru
          _
        // Predicated region
        $region25: #{tpu_custom_call.1} parent=11 // pred_check
          %p198 = pneg %p128
        $region26: #{tpu_custom_call.1} parent=11 // pred_check_branch
          %200 = sbr.rel (%p198) target = $region28
        $region27: #{tpu_custom_call.1} parent=11 // pred_region
          _
        $region28: #{tpu_custom_call.1} parent=11 // pred_fallthru
          _
      $region12: #{tpu_custom_call.1} parent=5 // pred_fallthru
        _
      %p201 = scmp.lt.s32.totalorder %s18, 3
      // Predicated region
      $region29: #{tpu_custom_call.1} parent=5 // pred_check
        %p202 = pneg %p201
      $region30: #{tpu_custom_call.1} parent=5 // pred_check_branch
        %204 = sbr.rel (%p202) target = $region32
      $region31: #{tpu_custom_call.1} parent=5 // pred_region
        // Predicated region
        $region33: #{tpu_custom_call.1} parent=31 // pred_check
          %p205 = pneg %p38
        $region34: #{tpu_custom_call.1} parent=31 // pred_check_branch
          %207 = sbr.rel (%p205) target = $region36
        $region35: #{tpu_custom_call.1} parent=31 // pred_region
          %s208 = sand.u32 %s28, 1
          %s209 = scalar_lea.sflag [#allocation3], %s208
          %s210 = sand.u32 %s28, 1
          %s211 = smul.addr %s210, 16
          %s212 = scalar_lea.vmem [#allocation2], %s211
          %s213 = smul.u32 2, %s18
          %s214 = ssub.s32 5, %s213
          %p215 = scmp.lt.s32.totalorder %s214, 2
          %s216 = scalar_select %p215, %s214, 2
          %s217 = smul.u32 128, %s216
          %s219 = ssub.s32 256, %s217
          %220 = vsyncadd %s209, %s219
          %p221 = scmp.ne.s32.totalorder 0, %s217
          %s222 = smul.addr %s213, 128
          %s223 = scalar_lea.hbm %s0, %s222
          %s224 = smul.u32 8, %s216
          %s225 = sshll.u32 %s212, 4
          %s226 = int_to_ptr.vmem [resolvable:$true] %s225
          %s227 = sshll.u32 %s224, 4
          %231 = dma.hbm_to_vmem [thread:$0]  (%p221), %s223, %s227, %s226, %s209, 128, 128, 8
        $region36: #{tpu_custom_call.1} parent=31 // pred_fallthru
          _
      $region32: #{tpu_custom_call.1} parent=5 // pred_fallthru
        _
      %p232 = scmp.le.s32.totalorder 1, %s18
      %p233 = scmp.lt.s32.totalorder %s18, 4
      %p234 = pnand %p232, %p233
      %p235 = pneg %p234
      // Predicated region
      $region37: #{tpu_custom_call.1} parent=5 // pred_check
        _
      $region38: #{tpu_custom_call.1} parent=5 // pred_check_branch
        %237 = sbr.rel (%p234) target = $region40
      $region39: #{tpu_custom_call.1} parent=5 // pred_region
        %s238 = ssub.s32 %s18, 1
        %s239 = sand.u32 %s31, 1
        %s240 = scalar_lea.sflag [#allocation3], %s239
        %s241 = sand.u32 %s31, 1
        %s242 = smul.addr %s241, 16
        %s243 = scalar_lea.vmem [#allocation2], %s242
        // Predicated region
        $region41: #{tpu_custom_call.1} parent=39 // pred_check
          %p244 = pneg %p44
        $region42: #{tpu_custom_call.1} parent=39 // pred_check_branch
          %246 = sbr.rel (%p244) target = $region44
        $region43: #{tpu_custom_call.1} parent=39 // pred_region
          %247 = dma.done %s240, 256
        $region44: #{tpu_custom_call.1} parent=39 // pred_fallthru
          _
        // Predicated region
        $region45: #{tpu_custom_call.1} parent=39 // pred_check
          %p248 = pneg %p65
        $region46: #{tpu_custom_call.1} parent=39 // pred_check_branch
          %250 = sbr.rel (%p248) target = $region48
        $region47: #{tpu_custom_call.1} parent=39 // pred_region
          %251 = dma.done [#allocation6], 768
        $region48: #{tpu_custom_call.1} parent=39 // pred_fallthru
          _
        // Predicated region
        $region49: #{tpu_custom_call.1} parent=39 // pred_check
          %p252 = pneg %p107
        $region50: #{tpu_custom_call.1} parent=39 // pred_check_branch
          %254 = sbr.rel (%p252) target = $region52
        $region51: #{tpu_custom_call.1} parent=39 // pred_region
          %255 = dma.done [#allocation6], 1536
        $region52: #{tpu_custom_call.1} parent=39 // pred_fallthru
          _
        %s256 = sand.u32 %s31, 1
        %s257 = scalar_lea.sflag [#allocation3], %s256
        %s258 = sand.u32 %s31, 1
        %s259 = smul.addr %s258, 16
        %s260 = scalar_lea.vmem [#allocation2], %s259
        %p261 = pneg %p44
        %p262 = pneg %p41
        %p263 = pneg %p65
        %p264 = pneg %p62
        %p265 = pneg %p86
        %p266 = pneg %p83
        %p267 = pneg %p107
        %p268 = pneg %p104
        %p269 = pneg %p128
        %p270 = pneg %p125
        %p271 = pneg %p154
        %p272 = pneg %p151
        %s273 = sand.u32 %s141, 1
        %s274 = scalar_lea.sflag [#allocation4], %s273
        %s275 = sand.u32 %s141, 1
        %s276 = smul.addr %s275, 16
        %s277 = scalar_lea.vmem [#allocation8], %s276
        %s278 = smul.u32 2, %s23
        %s279 = ssub.s32 5, %s278
        %p280 = scmp.lt.s32.totalorder %s279, 2
        %s281 = scalar_select %p280, %s279, 2
        %s282 = smul.u32 128, %s281
        %s283 = smul.u32 2, %s23
        %s284 = ssub.s32 5, %s283
        %p285 = scmp.lt.s32.totalorder %s284, 2
        %s286 = scalar_select %p285, %s284, 2
        %s287 = smul.u32 128, %s286
        %v289 = vld [vmem:[%s243] sm:$0xff]
        %v290 = vld [vmem:[%s243 + $0x8] sm:$0xff]
        %v291 = vpack.c.bf16 %v290, %v289
        %v292 = vld [vmem:[#allocation5] sm:$0xff]
        %v293 = vld [vmem:[#allocation5 + $0x8] sm:$0xff]
        %v294 = vld [vmem:[#allocation5 + $0x10] sm:$0xff]
        %v295 = vld [vmem:[#allocation5 + $0x18] sm:$0xff]
        %v296 = vld [vmem:[#allocation5 + $0x20] sm:$0xff]
        %v297 = vld [vmem:[#allocation5 + $0x28] sm:$0xff]
        %v298 = vld [vmem:[%s2] sm:$0x3]
        %v300 = vlaneseq
        %v301 = vshrl.u32 %v300, 7
        %v302 = vsub.s32 0, %v301
        %v303 = vrot.slane %v298, %v302
        %v304 = vlaneseq
        %v305 = vshrl.u32 %v304, 7
        %v306 = vsub.s32 1, %v305
        %v307 = vrot.slane %v298, %v306
        %v316 = vunpack.c.l.b16 %v292
        %v317 = vunpack.c.h.b16 %v292
        %v318 = vunpack.c.l.b16 %v293
        %v319 = vunpack.c.h.b16 %v293
        %v320 = vunpack.c.l.b16 %v294
        %v321 = vunpack.c.h.b16 %v294
        %v322 = vunpack.c.l.b16 %v295
        %v323 = vunpack.c.h.b16 %v295
        %v324 = vunpack.c.l.b16 %v296
        %v325 = vunpack.c.h.b16 %v296
        %v326 = vunpack.c.l.b16 %v297
        %v327 = vunpack.c.h.b16 %v297
        %v328 = vpack.c.b16 %v318, %v316
        %v329 = vpack.c.b16 %v319, %v317
        %v330 = vpack.c.b16 %v322, %v320
        %v331 = vpack.c.b16 %v323, %v321
        %v332 = vpack.c.b16 %v326, %v324
        %v333 = vpack.c.b16 %v327, %v325
        %vm340 = vcmask 392192
        %v342 = vsel %vm340, %v291, 0
        %344 = vmatprep.subr.bf16.mxu0 %v329
        %345 = vmatpush1.bf16.msra.mxu0 %v328
        %346 = vmatprep.subr.bf16.mxu0 %v331
        %347 = vmatpush1.bf16.msra.mxu0 %v330
        %348 = vmatprep.subr.bf16.mxu0 %v333
        %349 = vmatpush1.bf16.msra.mxu0 %v332
        %350 = vmatprep.subr.bf16.mxu0 0
        %351 = vmatpush1.bf16.msra.mxu0 0
        %352 = vmatprep.subr.bf16.mxu0 0
        %353 = vmatpush1.bf16.msra.mxu0 0
        %354 = vmatprep.subr.bf16.mxu0 0
        %355 = vmatpush1.bf16.msra.mxu0 0
        %356 = vmatprep.subr.bf16.mxu0 0
        %357 = vmatpush1.bf16.msra.mxu0 0
        %358 = vmatprep.subr.bf16.mxu0 0
        %359 = vmatpush1.bf16.msra.mxu0 0
        %360 = vmatprep.subr.bf16.mxu0 0
        %361 = vmatpush1.bf16.msra.mxu0 0
        %362 = vmatprep.subr.bf16.mxu0 0
        %363 = vmatpush1.bf16.msra.mxu0 0
        %364 = vmatprep.subr.bf16.mxu0 0
        %365 = vmatpush1.bf16.msra.mxu0 0
        %366 = vmatprep.subr.bf16.mxu0 0
        %367 = vmatpush1.bf16.msra.mxu0 0
        %368 = vmatprep.subr.bf16.mxu0 0
        %369 = vmatpush1.bf16.msra.mxu0 0
        %370 = vmatprep.subr.bf16.mxu0 0
        %371 = vmatpush1.bf16.msra.mxu0 0
        %372 = vmatprep.subr.bf16.mxu0 0
        %373 = vmatpush1.bf16.msra.mxu0 0
        %374 = vmatprep.subr.bf16.mxu0 0
        %375 = vmatpush1.bf16.msra.mxu0 0
        %376 = vmatprep.mubr.bf16.mxu0 0
        %377 = vmatmul.mubr.bf16.gmra.mrb[0].mxu0 %v342
        %v378 = vpop.f32.mrb[0].mxu0
        %v379 = vadd.f32 %v303, %v378
        %v380 = vpop.f32.mrb[0].mxu0
        %v381 = vadd.f32 %v307, %v380
        %v382 = vpop.f32.mrb[0].mxu0
        %v383 = vadd.f32 %v303, %v382
        %v384 = vpop.f32.mrb[0].mxu0
        %v385 = vadd.f32 %v307, %v384
        %386 = vdwg.mxu0
        %v387 = vmax.f32 %v379, 0.0
        %v388 = vmax.f32 %v381, 0.0
        %v389 = vmax.f32 %v383, 0.0
        %v390 = vmax.f32 %v385, 0.0
        %v391 = vpack.c.bf16 %v389, %v387
        %v392 = vpack.c.bf16 %v390, %v388
        %v393 = vld [vmem:[#allocation7] sm:$0xf]
        %v394 = vld [vmem:[#allocation7 + $0x4] sm:$0xf]
        %v395 = vld [vmem:[#allocation7 + $0x8] sm:$0xf]
        %v396 = vld [vmem:[#allocation7 + $0xc] sm:$0xf]
        %v397 = vld [vmem:[#allocation7 + $0x10] sm:$0xf]
        %v398 = vld [vmem:[#allocation7 + $0x14] sm:$0xf]
        %v399 = vld [vmem:[#allocation7 + $0x18] sm:$0xf]
        %v400 = vld [vmem:[#allocation7 + $0x1c] sm:$0xf]
        %v401 = vld [vmem:[#allocation7 + $0x20] sm:$0xf]
        %v402 = vld [vmem:[#allocation7 + $0x24] sm:$0xf]
        %v403 = vld [vmem:[#allocation7 + $0x28] sm:$0xf]
        %v404 = vld [vmem:[#allocation7 + $0x2c] sm:$0xf]
        %v405 = vld [vmem:[#allocation7 + $0x30] sm:$0xf]
        %v406 = vld [vmem:[#allocation7 + $0x34] sm:$0xf]
        %v407 = vld [vmem:[#allocation7 + $0x38] sm:$0xf]
        %v408 = vld [vmem:[#allocation7 + $0x3c] sm:$0xf]
        %v409 = vld [vmem:[#allocation7 + $0x40] sm:$0xf]
        %v410 = vld [vmem:[#allocation7 + $0x44] sm:$0xf]
        %v411 = vld [vmem:[#allocation7 + $0x48] sm:$0xf]
        %v412 = vld [vmem:[#allocation7 + $0x4c] sm:$0xf]
        %v413 = vld [vmem:[#allocation7 + $0x50] sm:$0xf]
        %v414 = vld [vmem:[#allocation7 + $0x54] sm:$0xf]
        %v415 = vld [vmem:[#allocation7 + $0x58] sm:$0xf]
        %v416 = vld [vmem:[#allocation7 + $0x5c] sm:$0xf]
        %v417 = vld [vmem:[%s4] sm:$0x1]
        %v419 = vlaneseq
        %v420 = vshrl.u32 %v419, 7
        %v421 = vsub.s32 0, %v420
        %v422 = vrot.slane %v417, %v421
        %v448 = vunpack.c.l.b16 %v393
        %v449 = vunpack.c.l.b16 %v394
        %v450 = vunpack.c.l.b16 %v395
        %v451 = vunpack.c.l.b16 %v396
        %v452 = vunpack.c.l.b16 %v397
        %v453 = vunpack.c.l.b16 %v398
        %v454 = vunpack.c.l.b16 %v399
        %v455 = vunpack.c.l.b16 %v400
        %v456 = vunpack.c.l.b16 %v401
        %v457 = vunpack.c.l.b16 %v402
        %v458 = vunpack.c.l.b16 %v403
        %v459 = vunpack.c.l.b16 %v404
        %v460 = vunpack.c.l.b16 %v405
        %v461 = vunpack.c.l.b16 %v406
        %v462 = vunpack.c.l.b16 %v407
        %v463 = vunpack.c.l.b16 %v408
        %v464 = vunpack.c.l.b16 %v409
        %v465 = vunpack.c.l.b16 %v410
        %v466 = vunpack.c.l.b16 %v411
        %v467 = vunpack.c.l.b16 %v412
        %v468 = vunpack.c.l.b16 %v413
        %v469 = vunpack.c.l.b16 %v414
        %v470 = vunpack.c.l.b16 %v415
        %v471 = vunpack.c.l.b16 %v416
        %v472 = vpack.c.b16 %v449, %v448
        %v473 = vpack.c.b16 %v451, %v450
        %v474 = vpack.c.b16 %v453, %v452
        %v475 = vpack.c.b16 %v455, %v454
        %v476 = vpack.c.b16 %v457, %v456
        %v477 = vpack.c.b16 %v459, %v458
        %v478 = vpack.c.b16 %v461, %v460
        %v479 = vpack.c.b16 %v463, %v462
        %v480 = vpack.c.b16 %v465, %v464
        %v481 = vpack.c.b16 %v467, %v466
        %v482 = vpack.c.b16 %v469, %v468
        %v483 = vpack.c.b16 %v471, %v470
        %vm496 = vcmask 523264
        %v498 = vsel %vm496, %v392, 0
        %500 = vmatprep.subr.bf16.mxu0 0
        %501 = vmatpush1.bf16.msra.mxu0 %v472
        %502 = vmatprep.subr.bf16.mxu0 0
        %503 = vmatpush1.bf16.msra.mxu0 %v473
        %504 = vmatprep.subr.bf16.mxu0 0
        %505 = vmatpush1.bf16.msra.mxu0 %v474
        %506 = vmatprep.subr.bf16.mxu0 0
        %507 = vmatpush1.bf16.msra.mxu0 %v475
        %508 = vmatprep.subr.bf16.mxu0 0
        %509 = vmatpush1.bf16.msra.mxu0 %v476
        %510 = vmatprep.subr.bf16.mxu0 0
        %511 = vmatpush1.bf16.msra.mxu0 %v477
        %512 = vmatprep.subr.bf16.mxu0 0
        %513 = vmatpush1.bf16.msra.mxu0 %v478
        %514 = vmatprep.subr.bf16.mxu0 0
        %515 = vmatpush1.bf16.msra.mxu0 %v479
        %516 = vmatprep.subr.bf16.mxu0 0
        %517 = vmatpush1.bf16.msra.mxu0 %v480
        %518 = vmatprep.subr.bf16.mxu0 0
        %519 = vmatpush1.bf16.msra.mxu0 %v481
        %520 = vmatprep.subr.bf16.mxu0 0
        %521 = vmatpush1.bf16.msra.mxu0 %v482
        %522 = vmatprep.subr.bf16.mxu0 0
        %523 = vmatpush1.bf16.msra.mxu0 %v483
        %524 = vmatprep.subr.bf16.mxu0 0
        %525 = vmatpush1.bf16.msra.mxu0 0
        %526 = vmatprep.subr.bf16.mxu0 0
        %527 = vmatpush1.bf16.msra.mxu0 0
        %528 = vmatprep.subr.bf16.mxu0 0
        %529 = vmatpush1.bf16.msra.mxu0 0
        %530 = vmatprep.subr.bf16.mxu0 0
        %531 = vmatpush1.bf16.msra.mxu0 0
        %532 = vmatprep.mubr.bf16.mxu0 %v498
        %533 = vmatmul.mubr.bf16.gmra.mrb[0].mxu0 %v391
        %v534 = vpop.f32.mrb[0].mxu0
        %v535 = vadd.f32 %v422, %v534
        %v536 = vpop.f32.mrb[0].mxu0
        %v537 = vpop.f32.mrb[0].mxu0
        %v538 = vadd.f32 %v422, %v537
        %v539 = vpop.f32.mrb[0].mxu0
        %540 = vdwg.mxu0
        %v541 = vsub.f32 0.0, %v535
        %v542 = vsub.f32 0.0, %v538
        %v543 = vmul.f32 %v541, 1.442695
        %v544 = vpow.pop %v543
        %v545 = vmul.f32 %v542, 1.442695
        %v546 = vpow.pop %v545
        %v547 = vadd.f32 %v544, 1.0
        %v548 = vadd.f32 %v546, 1.0
        %v549 = vrcp.pop %v547
        %v550 = vrcp.pop %v548
        %v551 = vmin.f32 %v549, 1.0
        %v552 = vmin.f32 %v550, 1.0
        %553 = vst [vmem:[%s277] sm:$0xff] %v551
        %554 = vst [vmem:[%s277 + $0x8] sm:$0xff] %v552
        %s555 = sand.u32 %s141, 1
        %s556 = scalar_lea.sflag [#allocation4], %s555
        %s557 = sand.u32 %s141, 1
        %s558 = smul.addr %s557, 16
        %s559 = scalar_lea.vmem [#allocation8], %s558
        // Predicated region
        $region53: #{tpu_custom_call.1} parent=39 // pred_check
          %p560 = pneg %p151
        $region54: #{tpu_custom_call.1} parent=39 // pred_check_branch
          %562 = sbr.rel (%p560) target = $region56
        $region55: #{tpu_custom_call.1} parent=39 // pred_region
          %s563 = smul.u32 2, %s23
          %s564 = ssub.s32 5, %s563
          %p565 = scmp.lt.s32.totalorder %s564, 2
          %s566 = scalar_select %p565, %s564, 2
          %s567 = smul.u32 128, %s566
          %s569 = ssub.s32 256, %s567
          %570 = vsyncadd %s556, %s569
          %p571 = scmp.ne.s32.totalorder 0, %s567
          %s572 = smul.addr %s563, 128
          %s573 = scalar_lea.hbm %s5, %s572
          %s574 = smul.u32 8, %s566
          %s575 = sshll.u32 %s559, 4
          %s576 = int_to_ptr.vmem [resolvable:$true] %s575
          %s577 = sshll.u32 %s574, 4
          %581 = dma.vmem_to_hbm [thread:$0]  (%p571), %s576, %s577, %s573, %s556, 128, 128, 8
        $region56: #{tpu_custom_call.1} parent=39 // pred_fallthru
          _
      $region40: #{tpu_custom_call.1} parent=5 // pred_fallthru
        _
      %p582 = scmp.le.s32.totalorder 2, %s18
      // Predicated region
      $region57: #{tpu_custom_call.1} parent=5 // pred_check
        %p583 = pneg %p582
      $region58: #{tpu_custom_call.1} parent=5 // pred_check_branch
        %585 = sbr.rel (%p583) target = $region60
      $region59: #{tpu_custom_call.1} parent=5 // pred_region
        %s586 = ssub.s32 %s18, 2
        // Predicated region
        $region61: #{tpu_custom_call.1} parent=59 // pred_check
          %p587 = pneg %p157
        $region62: #{tpu_custom_call.1} parent=59 // pred_check_branch
          %589 = sbr.rel (%p587) target = $region64
        $region63: #{tpu_custom_call.1} parent=59 // pred_region
          %s590 = sand.u32 %s142, 1
          %s591 = scalar_lea.sflag [#allocation4], %s590
          %s592 = sand.u32 %s142, 1
          %s593 = smul.addr %s592, 16
          %s594 = scalar_lea.vmem [#allocation8], %s593
          %595 = dma.done %s591, 256
        $region64: #{tpu_custom_call.1} parent=59 // pred_fallthru
          _
      $region60: #{tpu_custom_call.1} parent=5 // pred_fallthru
        _
    $region6: #{tpu_custom_call.1} parent=1 // loop_footer
      %s22 = sadd.s32 1, %s18
    $region7: #{tpu_custom_call.1} parent=1 // loop_footer_branch
      %17 = sbr.rel target = $region3
    $region8: #{tpu_custom_call.1} parent=1 // loop_exit
      _
    %596 = vsyncpa [#allocation3], 1
    %s597 = scalar_lea.sflag [#allocation3], 1
    %598 = vsyncpa %s597, 1
    %599 = vsyncpa [#allocation6], 1
    %600 = vsyncpa [#allocation4], 1
    %s601 = scalar_lea.sflag [#allocation4], 1
    %602 = vsyncpa %s601, 1

</llo_original>
